<compile_context>
chip_gen: v6e
topology: v6e:2x2x1
jax: 0.10.0
libtpu: 0.0.40
codegen_flags: <defaults>
</compile_context>

<pallas_src>
import functools

import jax
import jax.numpy as jnp
from jax.experimental import pallas as pl
from jax.experimental.pallas import tpu as pltpu


def _round_up(x: int, m: int) -> int:
    return ((x + m - 1) // m) * m


def _cdiv(a: int, b: int) -> int:
    return -(-a // b)


def _mlp_kernel(x_ref, w1_ref, b1_ref, w2_ref, b2_ref, o_ref):
    # fc1: (TB, K) @ (K, H) + (1, H), f32 accumulation on the MXU.
    h = jnp.dot(x_ref[...], w1_ref[...], preferred_element_type=jnp.float32)
    h = jnp.maximum(h + b1_ref[...], 0.0)          # bias + ReLU on the VPU
    # dropout == identity in inference mode.
    # fc2: (TB, H) @ (H, N) + (1, N)
    y = jnp.dot(h, w2_ref[...], preferred_element_type=jnp.float32)
    o_ref[...] = (y + b2_ref[...]).astype(o_ref.dtype)


@functools.partial(jax.jit, static_argnames=("block_b",))
def text_classifier_forward(x, w1, b1, w2, b2, *, block_b: int = 512):
    """x: (B, input_size); w1: (in, 64); b1: (1, 64); w2: (64, out); b2: (1, out).

    Returns (B, output_size) f32.  block_b is the maximum batch tile; the same value is
    appropriate on v5e/v6e/v7x (the kernel is HBM/overhead bound, not MXU bound).
    """
    B, K = x.shape
    H = w1.shape[1]
    N = w2.shape[1]
    f32 = jnp.float32

    # Balanced batch tiling.  Ensure an even number of >=2 grid steps when the batch is big
    # enough, so v7x's two TensorCores both get work; keep per-tile padding < 8 rows.
    num_tiles = max(1, _cdiv(B, block_b))
    if B >= 16:
        num_tiles = max(2, num_tiles)
        if num_tiles % 2:
            num_tiles += 1
    TB = _round_up(_cdiv(B, num_tiles), 8)
    Bp = TB * num_tiles

    xp = x.astype(f32)
    if Bp != B:  # pad only the batch axis (static decision under jit)
        xp = jnp.pad(xp, ((0, Bp - B), (0, 0)))

    w1f = w1.astype(f32)
    b1f = b1.reshape(1, H).astype(f32)
    w2f = w2.astype(f32)
    b2f = b2.reshape(1, N).astype(f32)

    cost = pl.CostEstimate(
        flops=2 * Bp * (K * H + H * N),
        transcendentals=0,
        bytes_accessed=4 * (Bp * K + Bp * N + K * H + H * N + H + N),
    )

    out_p = pl.pallas_call(
        _mlp_kernel,
        out_shape=jax.ShapeDtypeStruct((Bp, N), f32),
        grid=(num_tiles,),
        in_specs=[
            pl.BlockSpec((TB, K), lambda i: (i, 0)),   # x tile (K = full extent, no pad)
            pl.BlockSpec((K, H), lambda i: (0, 0)),    # W1, VMEM-resident across steps
            pl.BlockSpec((1, H), lambda i: (0, 0)),    # b1, resident
            pl.BlockSpec((H, N), lambda i: (0, 0)),    # W2, resident
            pl.BlockSpec((1, N), lambda i: (0, 0)),    # b2, resident
        ],
        out_specs=pl.BlockSpec((TB, N), lambda i: (i, 0)),   # true N columns, no column pad
        compiler_params=pltpu.CompilerParams(dimension_semantics=("parallel",)),
        cost_estimate=cost,
    )(xp, w1f, b1f, w2f, b2f)

    return out_p if Bp == B else out_p[:B]


def init_params(key, input_size, hidden, output_size):
    """Deterministic init mimicking nn.Linear's uniform(-1/sqrt(fan_in), 1/sqrt(fan_in))."""
    k1, k2, k3, k4 = jax.random.split(key, 4)
    bound1 = 1.0 / jnp.sqrt(jnp.float32(input_size))
    bound2 = 1.0 / jnp.sqrt(jnp.float32(hidden))
    w1 = jax.random.uniform(k1, (input_size, hidden), jnp.float32, -bound1, bound1)
    b1 = jax.random.uniform(k2, (1, hidden), jnp.float32, -bound1, bound1)
    w2 = jax.random.uniform(k3, (hidden, output_size), jnp.float32, -bound2, bound2)
    b2 = jax.random.uniform(k4, (1, output_size), jnp.float32, -bound2, bound2)
    return w1, b1, w2, b2


def _ref_forward(x, w1, b1, w2, b2):
    return jnp.maximum(x @ w1 + b1, 0.0) @ w2 + b2


if __name__ == "__main__":
    key = jax.random.PRNGKey(0)
    input_size, hidden, output_size = 32, 64, 16
    kx, kx2, kp = jax.random.split(key, 3)
    w1, b1, w2, b2 = init_params(kp, input_size, hidden, output_size)

    # Small demo batch (single grid step).
    batch = 8
    x = jax.random.normal(kx, (batch, input_size), jnp.float32)
    out = text_classifier_forward(x, w1, b1, w2, b2)
    jax.block_until_ready(out)
    ref = _ref_forward(x, w1, b1, w2, b2)
    assert out.shape == (batch, output_size)
    assert jnp.allclose(out, ref, atol=2e-5, rtol=2e-5)

    # Awkward batch exercising the multi-tile grid + balanced tiling + batch-pad/slice path.
    batch2 = 300
    x2 = jax.random.normal(kx2, (batch2, input_size), jnp.float32)
    out2 = text_classifier_forward(x2, w1, b1, w2, b2)
    jax.block_until_ready(out2)
    ref2 = _ref_forward(x2, w1, b1, w2, b2)
    assert out2.shape == (batch2, output_size)
    assert jnp.allclose(out2, ref2, atol=2e-5, rtol=2e-5)

    print("KERNEL_OK")
</pallas_src>

<mosaic_0001>
module attributes {stable_mosaic.version = 11 : i64} {
  func.func @_mlp_kernel(%arg0: i32, %arg1: memref<8x32xf32, #tpu.memory_space<vmem>>, %arg2: memref<32x64xf32, #tpu.memory_space<vmem>>, %arg3: memref<1x64xf32, #tpu.memory_space<vmem>>, %arg4: memref<64x16xf32, #tpu.memory_space<vmem>>, %arg5: memref<1x16xf32, #tpu.memory_space<vmem>>, %arg6: memref<8x16xf32, #tpu.memory_space<vmem>>) attributes {dimension_semantics = [#tpu.dimension_semantics<parallel>], iteration_bounds = array<i64: 1>, scalar_prefetch = 0 : i64, scratch_operands = 0 : i64, tpu.core_type = #tpu.core_type<tc>, window_params = [{transform_indices = @transform_0, window_bounds = array<i64: 8, 32>}, {pipeline_mode = #tpu.pipeline_mode<synchronous>, transform_indices = @transform_1, window_bounds = array<i64: 32, 64>}, {pipeline_mode = #tpu.pipeline_mode<synchronous>, transform_indices = @transform_2, window_bounds = array<i64: 1, 64>}, {pipeline_mode = #tpu.pipeline_mode<synchronous>, transform_indices = @transform_3, window_bounds = array<i64: 64, 16>}, {pipeline_mode = #tpu.pipeline_mode<synchronous>, transform_indices = @transform_4, window_bounds = array<i64: 1, 16>}, {transform_indices = @transform_5, window_bounds = array<i64: 8, 16>}]} {
    %c0 = arith.constant 0 : index
    %c0_0 = arith.constant 0 : index
    %0 = vector.load %arg1[%c0, %c0_0] : memref<8x32xf32, #tpu.memory_space<vmem>>, vector<8x32xf32>
    %c0_1 = arith.constant 0 : index
    %c0_2 = arith.constant 0 : index
    %1 = vector.load %arg2[%c0_1, %c0_2] : memref<32x64xf32, #tpu.memory_space<vmem>>, vector<32x64xf32>
    %cst = arith.constant dense<0.000000e+00> : vector<8x64xf32>
    %2 = tpu.matmul %0, %1, %cst {dimension_numbers = #tpu.dot_dimension_numbers<[1], [0], [0], [1], [0, 0, 1, 1], [], []>} : vector<8x32xf32>, vector<32x64xf32>, vector<8x64xf32> -> vector<8x64xf32>
    %c0_3 = arith.constant 0 : index
    %c0_4 = arith.constant 0 : index
    %3 = vector.load %arg3[%c0_3, %c0_4] : memref<1x64xf32, #tpu.memory_space<vmem>>, vector<1x64xf32>
    %4 = vector.broadcast %3 : vector<1x64xf32> to vector<8x64xf32>
    %5 = arith.addf %2, %4 : vector<8x64xf32>
    %cst_5 = arith.constant 0.000000e+00 : f32
    %6 = vector.broadcast %cst_5 : f32 to vector<8x64xf32>
    %7 = arith.maximumf %5, %6 : vector<8x64xf32>
    %c0_6 = arith.constant 0 : index
    %c0_7 = arith.constant 0 : index
    %8 = vector.load %arg4[%c0_6, %c0_7] : memref<64x16xf32, #tpu.memory_space<vmem>>, vector<64x16xf32>
    %cst_8 = arith.constant dense<0.000000e+00> : vector<8x16xf32>
    %9 = tpu.matmul %7, %8, %cst_8 {dimension_numbers = #tpu.dot_dimension_numbers<[1], [0], [0], [1], [0, 0, 1, 1], [], []>} : vector<8x64xf32>, vector<64x16xf32>, vector<8x16xf32> -> vector<8x16xf32>
    %c0_9 = arith.constant 0 : index
    %c0_10 = arith.constant 0 : index
    %10 = vector.load %arg5[%c0_9, %c0_10] : memref<1x16xf32, #tpu.memory_space<vmem>>, vector<1x16xf32>
    %11 = vector.broadcast %10 : vector<1x16xf32> to vector<8x16xf32>
    %12 = arith.addf %9, %11 : vector<8x16xf32>
    %c0_11 = arith.constant 0 : index
    %c0_12 = arith.constant 0 : index
    %13 = vector.load %arg6[%c0_11, %c0_12] : memref<8x16xf32, #tpu.memory_space<vmem>>, vector<8x16xf32>
    tpu.vector_store %arg6[%c0_11, %c0_12], %12 {strides = array<i32>} : memref<8x16xf32, #tpu.memory_space<vmem>>, vector<8x16xf32>,
    return
  }
  func.func @transform_0(%arg0: i32) -> (i32, i32) {
    %c0_i32 = arith.constant 0 : i32
    %c0_i32_0 = arith.constant 0 : i32
    return %arg0, %c0_i32 : i32, i32
  }
  func.func @transform_1(%arg0: i32) -> (i32, i32) {
    %c0_i32 = arith.constant 0 : i32
    %c0_i32_0 = arith.constant 0 : i32
    %c0_i32_1 = arith.constant 0 : i32
    return %c0_i32, %c0_i32_0 : i32, i32
  }
  func.func @transform_2(%arg0: i32) -> (i32, i32) {
    %c0_i32 = arith.constant 0 : i32
    %c0_i32_0 = arith.constant 0 : i32
    %c0_i32_1 = arith.constant 0 : i32
    return %c0_i32, %c0_i32_0 : i32, i32
  }
  func.func @transform_3(%arg0: i32) -> (i32, i32) {
    %c0_i32 = arith.constant 0 : i32
    %c0_i32_0 = arith.constant 0 : i32
    %c0_i32_1 = arith.constant 0 : i32
    return %c0_i32, %c0_i32_0 : i32, i32
  }
  func.func @transform_4(%arg0: i32) -> (i32, i32) {
    %c0_i32 = arith.constant 0 : i32
    %c0_i32_0 = arith.constant 0 : i32
    %c0_i32_1 = arith.constant 0 : i32
    return %c0_i32, %c0_i32_0 : i32, i32
  }
  func.func @transform_5(%arg0: i32) -> (i32, i32) {
    %c0_i32 = arith.constant 0 : i32
    %c0_i32_0 = arith.constant 0 : i32
    return %arg0, %c0_i32 : i32, i32
  }
}

</mosaic_0001>

<llo_original>
// kernel: text_classifier_forward.1
$region0: #{text_classifier_forward.1}
  #allocation0 [shape = 'u32[]', space=smem, size = 0x4, offset = 0x4, fixed_abs, tag = 'smem constant byte address 0x4 - core index']
  #allocation1 [shape = 'u32[144,128]{1,0:T(1,128)}', space=vmem, size = 0x12000, scoped, tag = 'internal scratch']
  %s0 = inlined_call_operand.vmem [shape: f32[8,32], index: 0, kind: input, shape index: {}]
  %s1 = inlined_call_operand.vmem [shape: f32[32,64], index: 1, kind: input, shape index: {}]
  %s2 = inlined_call_operand.vmem [shape: f32[1,64], index: 2, kind: input, shape index: {}]
  %s3 = inlined_call_operand.vmem [shape: f32[64,16], index: 3, kind: input, shape index: {}]
  %s4 = inlined_call_operand.vmem [shape: f32[1,16], index: 4, kind: input, shape index: {}]
  %s5 = inlined_call_operand.hbm [shape: f32[8,16], index: 5, kind: output, shape index: {}]
  %s6 = sld [smem:[#allocation0]]
  $region30: #{text_classifier_forward.1} parent=0
    _
  %s8 = ssub.s32 1, %s6
  %s9 = scalar_select 0, %s8, %s6
  $region1: #{text_classifier_forward.1} parent=0
    #allocation2 [shape = 'u8[4096]{0}', space=vmem, size = 0x1000, scoped, tag = 'output window, operand 0, single buffered']
    #allocation3 [shape = 's32[1]{0}', space=sflag, size = 0x4, scoped, tag = 'scoped memory for text_classifier_forward.1']
    %10 = vsyncpa [#allocation3], 0
    // Predicated region
    $region2: #{text_classifier_forward.1} parent=1 // pred_check
      _
    $region3: #{text_classifier_forward.1} parent=1 // pred_check_branch
      %12 = sbr.rel (0) target = $region5
    $region4: #{text_classifier_forward.1} parent=1 // pred_region
      _
    $region5: #{text_classifier_forward.1} parent=1 // pred_fallthru
      _
    // Predicated region
    $region6: #{text_classifier_forward.1} parent=1 // pred_check
      _
    $region7: #{text_classifier_forward.1} parent=1 // pred_check_branch
      %14 = sbr.rel (0) target = $region9
    $region8: #{text_classifier_forward.1} parent=1 // pred_region
      _
    $region9: #{text_classifier_forward.1} parent=1 // pred_fallthru
      _
    // Predicated region
    $region10: #{text_classifier_forward.1} parent=1 // pred_check
      _
    $region11: #{text_classifier_forward.1} parent=1 // pred_check_branch
      %16 = sbr.rel (0) target = $region13
    $region12: #{text_classifier_forward.1} parent=1 // pred_region
      _
    $region13: #{text_classifier_forward.1} parent=1 // pred_fallthru
      _
    // Predicated region
    $region14: #{text_classifier_forward.1} parent=1 // pred_check
      _
    $region15: #{text_classifier_forward.1} parent=1 // pred_check_branch
      %18 = sbr.rel (0) target = $region17
    $region16: #{text_classifier_forward.1} parent=1 // pred_region
      _
    $region17: #{text_classifier_forward.1} parent=1 // pred_fallthru
      _
    // Predicated region
    $region18: #{text_classifier_forward.1} parent=1 // pred_check
      _
    $region19: #{text_classifier_forward.1} parent=1 // pred_check_branch
      %20 = sbr.rel (0) target = $region21
    $region20: #{text_classifier_forward.1} parent=1 // pred_region
      _
    $region21: #{text_classifier_forward.1} parent=1 // pred_fallthru
      _
    %v21 = vld [vmem:[%s0] sm:$0xff]
    %v22 = vld [vmem:[%s1] sm:$0xff]
    %v23 = vld [vmem:[%s1 + $0x8] sm:$0xff]
    %v24 = vld [vmem:[%s1 + $0x10] sm:$0xff]
    %v25 = vld [vmem:[%s1 + $0x18] sm:$0xff]
    %v26 = vld [vmem:[%s2] sm:$0x1]
    %v28 = vlaneseq
    %v29 = vshrl.u32 %v28, 7
    %v30 = vsub.s32 0, %v29
    %v31 = vrot.slane %v26, %v30
    %vm33 = vcmask 261120
    %v35 = vsel %vm33, %v21, 0
    %37 = vmatprep.subr.mxu0 0.0
    %38 = vmatpush1.msra.mxu0 0.0
    %39 = vmatprep.subr.mxu0 0.0
    %40 = vmatpush1.msra.mxu0 0.0
    %41 = vmatprep.subr.mxu0 0.0
    %42 = vmatpush1.msra.mxu0 0.0
    %43 = vmatprep.subr.mxu0 0.0
    %44 = vmatpush1.msra.mxu0 0.0
    %45 = vmatprep.subr.mxu0 0.0
    %46 = vmatpush1.msra.mxu0 0.0
    %47 = vmatprep.subr.mxu0 0.0
    %48 = vmatpush1.msra.mxu0 0.0
    %49 = vmatprep.subr.mxu0 0.0
    %50 = vmatpush1.msra.mxu0 0.0
    %51 = vmatprep.subr.mxu0 0.0
    %52 = vmatpush1.msra.mxu0 0.0
    %53 = vmatprep.subr.mxu0 0.0
    %54 = vmatpush1.msra.mxu0 0.0
    %55 = vmatprep.subr.mxu0 0.0
    %56 = vmatpush1.msra.mxu0 0.0
    %57 = vmatprep.subr.mxu0 0.0
    %58 = vmatpush1.msra.mxu0 0.0
    %59 = vmatprep.subr.mxu0 0.0
    %60 = vmatpush1.msra.mxu0 0.0
    %61 = vmatprep.subr.mxu0 0.0
    %62 = vmatpush1.msra.mxu0 %v25
    %63 = vmatprep.subr.mxu0 0.0
    %64 = vmatpush1.msra.mxu0 %v24
    %65 = vmatprep.subr.mxu0 0.0
    %66 = vmatpush1.msra.mxu0 %v23
    %67 = vmatprep.subr.mxu0 0.0
    %68 = vmatpush1.msra.mxu0 %v22
    %69 = vmatprep.subr.mxu0 0.0
    %70 = vmatpush2.msra.mxu0 0.0
    %71 = vmatprep.subr.mxu0 0.0
    %72 = vmatpush2.msra.mxu0 0.0
    %73 = vmatprep.subr.mxu0 0.0
    %74 = vmatpush2.msra.mxu0 0.0
    %75 = vmatprep.subr.mxu0 0.0
    %76 = vmatpush2.msra.mxu0 0.0
    %77 = vmatprep.subr.mxu0 0.0
    %78 = vmatpush2.msra.mxu0 0.0
    %79 = vmatprep.subr.mxu0 0.0
    %80 = vmatpush2.msra.mxu0 0.0
    %81 = vmatprep.subr.mxu0 0.0
    %82 = vmatpush2.msra.mxu0 0.0
    %83 = vmatprep.subr.mxu0 0.0
    %84 = vmatpush2.msra.mxu0 0.0
    %85 = vmatprep.subr.mxu0 0.0
    %86 = vmatpush2.msra.mxu0 0.0
    %87 = vmatprep.subr.mxu0 0.0
    %88 = vmatpush2.msra.mxu0 0.0
    %89 = vmatprep.subr.mxu0 0.0
    %90 = vmatpush2.msra.mxu0 0.0
    %91 = vmatprep.subr.mxu0 0.0
    %92 = vmatpush2.msra.mxu0 0.0
    %93 = vmatprep.subr.mxu0 0.0
    %94 = vmatpush2.msra.mxu0 0.0
    %95 = vmatprep.subr.mxu0 0.0
    %96 = vmatpush2.msra.mxu0 0.0
    %97 = vmatprep.subr.mxu0 0.0
    %98 = vmatpush2.msra.mxu0 0.0
    %99 = vmatprep.subr.mxu0 0.0
    %100 = vmatpush2.msra.mxu0 0.0
    %101 = vmatprep.mubr.f32.mxu0 0.0
    %102 = vmatmul.mubr.f32.gmra.mxu0 %v35
    %v103 = vpop.f32.mrf.mxu0
    %v104 = vadd.f32 %v31, %v103
    %v105 = vpop.f32.mrf.mxu0
    %106 = vdwg.mxu0
    %v107 = vmax.f32 %v104, 0.0
    %v108 = vld [vmem:[%s3] sm:$0xff]
    %v109 = vld [vmem:[%s3 + $0x8] sm:$0xff]
    %v110 = vld [vmem:[%s3 + $0x10] sm:$0xff]
    %v111 = vld [vmem:[%s3 + $0x18] sm:$0xff]
    %v112 = vld [vmem:[%s3 + $0x20] sm:$0xff]
    %v113 = vld [vmem:[%s3 + $0x28] sm:$0xff]
    %v114 = vld [vmem:[%s3 + $0x30] sm:$0xff]
    %v115 = vld [vmem:[%s3 + $0x38] sm:$0xff]
    %v116 = vld [vmem:[%s4] sm:$0x1]
    %v118 = vlaneseq
    %v119 = vshrl.u32 %v118, 7
    %v120 = vsub.s32 0, %v119
    %v121 = vrot.slane %v116, %v120
    %vm123 = vcmask 523264
    %v125 = vsel %vm123, %v107, 0
    %127 = vmatprep.subr.mxu0 0.0
    %128 = vmatpush1.msra.mxu0 0.0
    %129 = vmatprep.subr.mxu0 0.0
    %130 = vmatpush1.msra.mxu0 0.0
    %131 = vmatprep.subr.mxu0 0.0
    %132 = vmatpush1.msra.mxu0 0.0
    %133 = vmatprep.subr.mxu0 0.0
    %134 = vmatpush1.msra.mxu0 0.0
    %135 = vmatprep.subr.mxu0 0.0
    %136 = vmatpush1.msra.mxu0 0.0
    %137 = vmatprep.subr.mxu0 0.0
    %138 = vmatpush1.msra.mxu0 0.0
    %139 = vmatprep.subr.mxu0 0.0
    %140 = vmatpush1.msra.mxu0 0.0
    %141 = vmatprep.subr.mxu0 0.0
    %142 = vmatpush1.msra.mxu0 0.0
    %143 = vmatprep.subr.mxu0 0.0
    %144 = vmatpush1.msra.mxu0 %v115
    %145 = vmatprep.subr.mxu0 0.0
    %146 = vmatpush1.msra.mxu0 %v114
    %147 = vmatprep.subr.mxu0 0.0
    %148 = vmatpush1.msra.mxu0 %v113
    %149 = vmatprep.subr.mxu0 0.0
    %150 = vmatpush1.msra.mxu0 %v112
    %151 = vmatprep.subr.mxu0 0.0
    %152 = vmatpush1.msra.mxu0 %v111
    %153 = vmatprep.subr.mxu0 0.0
    %154 = vmatpush1.msra.mxu0 %v110
    %155 = vmatprep.subr.mxu0 0.0
    %156 = vmatpush1.msra.mxu0 %v109
    %157 = vmatprep.subr.mxu0 0.0
    %158 = vmatpush1.msra.mxu0 %v108
    %159 = vmatprep.subr.mxu0 0.0
    %160 = vmatpush2.msra.mxu0 0.0
    %161 = vmatprep.subr.mxu0 0.0
    %162 = vmatpush2.msra.mxu0 0.0
    %163 = vmatprep.subr.mxu0 0.0
    %164 = vmatpush2.msra.mxu0 0.0
    %165 = vmatprep.subr.mxu0 0.0
    %166 = vmatpush2.msra.mxu0 0.0
    %167 = vmatprep.subr.mxu0 0.0
    %168 = vmatpush2.msra.mxu0 0.0
    %169 = vmatprep.subr.mxu0 0.0
    %170 = vmatpush2.msra.mxu0 0.0
    %171 = vmatprep.subr.mxu0 0.0
    %172 = vmatpush2.msra.mxu0 0.0
    %173 = vmatprep.subr.mxu0 0.0
    %174 = vmatpush2.msra.mxu0 0.0
    %175 = vmatprep.subr.mxu0 0.0
    %176 = vmatpush2.msra.mxu0 0.0
    %177 = vmatprep.subr.mxu0 0.0
    %178 = vmatpush2.msra.mxu0 0.0
    %179 = vmatprep.subr.mxu0 0.0
    %180 = vmatpush2.msra.mxu0 0.0
    %181 = vmatprep.subr.mxu0 0.0
    %182 = vmatpush2.msra.mxu0 0.0
    %183 = vmatprep.subr.mxu0 0.0
    %184 = vmatpush2.msra.mxu0 0.0
    %185 = vmatprep.subr.mxu0 0.0
    %186 = vmatpush2.msra.mxu0 0.0
    %187 = vmatprep.subr.mxu0 0.0
    %188 = vmatpush2.msra.mxu0 0.0
    %189 = vmatprep.subr.mxu0 0.0
    %190 = vmatpush2.msra.mxu0 0.0
    %191 = vmatprep.mubr.f32.mxu0 0.0
    %192 = vmatmul.mubr.f32.gmra.mxu0 %v125
    %v193 = vpop.f32.mrf.mxu0
    %v194 = vadd.f32 %v121, %v193
    %v195 = vpop.f32.mrf.mxu0
    %196 = vdwg.mxu0
    %vm197 = vcmask 130048
    %198 = vst.msk [vmem:[#allocation2] sm:$0xff] %vm197, %v194
    // Predicated region
    $region22: #{text_classifier_forward.1} parent=1 // pred_check
      _
    $region23: #{text_classifier_forward.1} parent=1 // pred_check_branch
      %200 = sbr.rel (0) target = $region25
    $region24: #{text_classifier_forward.1} parent=1 // pred_region
      %s202 = ssub.s32 128, 128
      %203 = vsyncadd [#allocation3], %s202
      %s205 = sshll.u32 [#allocation2], 4
      %s206 = int_to_ptr.vmem [resolvable:$true] %s205
      %208 = dma.vmem_to_hbm [thread:$0]  %s206, 128, %s5, [#allocation3]
    $region25: #{text_classifier_forward.1} parent=1 // pred_fallthru
      _
    // Predicated region
    $region26: #{text_classifier_forward.1} parent=1 // pred_check
      _
    $region27: #{text_classifier_forward.1} parent=1 // pred_check_branch
      %210 = sbr.rel (0) target = $region29
    $region28: #{text_classifier_forward.1} parent=1 // pred_region
      %211 = dma.done [#allocation3], 128
    $region29: #{text_classifier_forward.1} parent=1 // pred_fallthru
      _
    %212 = vsyncpa [#allocation3], 1

</llo_original>
